<compile_context>
chip_gen: v6e
topology: v6e:2x2x1
jax: 0.10.0
libtpu: 0.0.40
codegen_flags: <defaults>
</compile_context>

<pallas_src>
import functools
import math

import jax
import jax.numpy as jnp
from jax import lax
from jax.experimental import pallas as pl
from jax.experimental.pallas import tpu as pltpu


def _upsample_conv_kernel(x_ref, w_ref, b_ref, o_ref, *, neg_slope):
    """One grid step == (batch element, row tile).

    x_ref : (1, C_in, TH*W)         NCHW input rows (consumed directly, no transpose pass)
    w_ref : (C_in, s*s*C_out)       all K*K taps fused, phase-(sh, sw, c) ordered
    b_ref : (1, s*s*C_out)          bias replicated per phase (f32)
    o_ref : (1, TH, s, W, s*C_out)  phase-interleaved output tile
    """
    _, th, s, w_dim, sc = o_ref.shape
    x = x_ref[0].astype(w_ref.dtype)                         # (C_in, TH*W), bf16 for MXU
    # Single fused MXU matmul over every tap/phase; contracting on dim 0 of both
    # operands lets the MXU consume the channel-major (NCHW) LHS without a transpose.
    y = lax.dot_general(x, w_ref[...],
                        dimension_numbers=(((0,), (0,)), ((), ())),
                        preferred_element_type=jnp.float32)  # (TH*W, s*s*C_out) f32
    y = y + b_ref[...]                                       # fused bias
    y = jnp.where(y >= 0, y, neg_slope * y)                  # fused LeakyReLU(0.2)
    # Fused phase interleave: s static lane-aligned slices, one store each.  The
    # (TH*W, s*C_out) -> (TH, W, s*C_out) view only splits the sublane axis (lanes
    # untouched); relayout-free whenever W % 8 == 0.
    for sh in range(s):
        o_ref[0, :, sh, :, :] = (
            y[:, sh * sc:(sh + 1) * sc].reshape(th, w_dim, sc).astype(o_ref.dtype))


def _tpu_vmem_capacity_bytes():
    try:
        cap = getattr(pltpu.get_tpu_info(), "vmem_capacity_bytes", None)
        if cap:
            return int(cap)
    except Exception:
        pass
    return 64 << 20                       # conservative (v7x-class) fallback


def _vmem_budgets():
    cap = _tpu_vmem_capacity_bytes()
    if cap <= (64 << 20):                 # v7x: 64 MiB/TC -> tight tiles, <=40 MiB request
        return 24 << 20, 40 << 20
    return 44 << 20, 96 << 20             # v5e / v6e: 128 MiB VMEM -> big row tiles


def _choose_row_tile(N, H, W, C_in, P, x_itemsize, w_itemsize, out_itemsize,
                     tile_budget):
    """Row tile TH: lane-aligned input blocks ((TH*W) % 128 == 0), fits the VMEM
    budget, prefers >=4 total grid steps (megacore), never one whole-image tile."""
    q = 128 // math.gcd(W, 128)           # TH multiple of q keeps TH*W lane-aligned
    if q > H:
        return H                          # tiny map: full-height tile == full array dim
    per_row = W * (2 * C_in * x_itemsize          # double-buffered input tile
                   + 2 * P * out_itemsize         # double-buffered output tile
                   + P * 4 + C_in * w_itemsize)   # in-kernel f32 y + cast copy of x
    cands = list(range(q, H + 1, q))
    fitting = [t for t in cands if t * per_row <= tile_budget] or [cands[0]]
    for min_steps in (4, 2, 1):           # keep both v7x TensorCores busy when possible
        good = [t for t in fitting if N * (-(-H // t)) >= min_steps]
        if good:
            return max(good)
    return max(fitting)


def upsample_conv_layer(x, weight, bias, *, stride=2, negative_slope=0.2,
                        compute_dtype=jnp.bfloat16, out_dtype=jnp.bfloat16,
                        output_layout="NCHW"):
    """UpsampleConvLayer.forward: ConvTranspose2d(C_in, C_out, K, stride) + LeakyReLU(0.2).

    x:      (N, C_in, H, W)      NCHW, consumed directly (no HBM layout pass)
    weight: (C_in, C_out, K, K)  PyTorch ConvTranspose2d layout
    bias:   (C_out,)
    Returns NCHW (default, PyTorch parity) or NHWC (`output_layout="NHWC"`, zero
    post-kernel transposes — use it when the surrounding decoder is NHWC end-to-end).
    """
    N, C_in, H, W = x.shape
    w_cin, C_out, K, Kw = weight.shape
    assert K == Kw and w_cin == C_in
    s = stride
    # DeepCMorph always uses kernel_size == stride == 2: every output pixel gets exactly
    # one tap, so the output is a pure phase decomposition with no overlap-add.
    assert K <= s, "only the DeepCMorph case kernel_size <= stride is implemented"

    H_out = (H - 1) * s + K
    W_out = (W - 1) * s + K
    P = s * s * C_out

    # ---- tiny one-time weight/bias plumbing (no HBM pass over activations) ----
    w_t = jnp.transpose(weight, (2, 3, 0, 1))                       # (K, K, C_in, C_out)
    w_pad = jnp.zeros((s, s, C_in, C_out), weight.dtype).at[:K, :K].set(w_t)
    w2d = jnp.transpose(w_pad, (2, 0, 1, 3)).reshape(C_in, P).astype(compute_dtype)
    b2d = jnp.tile(bias.astype(jnp.float32), s * s).reshape(1, P)

    # Input stays NCHW; merging H,W is a contiguous (free) reshape, not a transpose.
    x_flat = x.reshape(N, C_in, H * W)

    x_itemsize = x.dtype.itemsize
    w_itemsize = jnp.dtype(compute_dtype).itemsize
    out_itemsize = jnp.dtype(out_dtype).itemsize

    tile_budget, limit_cap = _vmem_budgets()
    TH = _choose_row_tile(N, H, W, C_in, P, x_itemsize, w_itemsize, out_itemsize,
                          tile_budget)
    grid = (N, pl.cdiv(H, TH))            # partial last row tile is padded/masked

    # Explicit VMEM request from actual needs (v7x-safe cap), with slack.
    in_tile = TH * W * C_in * x_itemsize
    out_tile = TH * W * P * out_itemsize
    scratch = TH * W * (P * 4 + C_in * w_itemsize)
    w_bytes = C_in * P * w_itemsize + P * 4
    vmem_limit = int(min(limit_cap,
                         max(2 * (in_tile + out_tile) + 2 * w_bytes + scratch + (2 << 20),
                             16 << 20)))

    cost = pl.CostEstimate(
        flops=2 * N * H * W * C_in * P,
        transcendentals=0,
        bytes_accessed=N * H * W * (C_in * x_itemsize + P * out_itemsize)
        + C_in * P * w_itemsize)

    kernel = functools.partial(_upsample_conv_kernel, neg_slope=negative_slope)

    # TODO(synk): for s*C_out < 128 the interleaved store would fall back to masked
    # (<128-lane) writes; DeepCMorph's smallest decoder layer has C_out = 64
    # (s*C_out = 128), so a phase-major fallback layout is not implemented.
    phase = pl.pallas_call(
        kernel,
        out_shape=jax.ShapeDtypeStruct((N, H, s, W, s * C_out), out_dtype),
        grid=grid,
        in_specs=[
            pl.BlockSpec((1, C_in, TH * W), lambda n, r: (n, 0, r)),
            pl.BlockSpec((C_in, P), lambda n, r: (0, 0)),
            pl.BlockSpec((1, P), lambda n, r: (0, 0)),
        ],
        out_specs=pl.BlockSpec((1, TH, s, W, s * C_out),
                               lambda n, r: (n, r, 0, 0, 0)),
        compiler_params=pltpu.CompilerParams(
            dimension_semantics=("parallel", "parallel"),
            vmem_limit_bytes=vmem_limit,
        ),
        cost_estimate=cost,
    )(x_flat, w2d, b2d)

    # (N, H, s, W, s*C_out) -> (N, H*s, W*s, C_out): memory-order preserving => free.
    full = phase.reshape(N, H * s, W * s, C_out)
    if K < s:                              # never taken for DeepCMorph (K == s == 2)
        full = full[:, :H_out, :W_out, :]
    if output_layout == "NHWC":
        return full                        # zero post-kernel transposes
    return jnp.transpose(full, (0, 3, 1, 2))   # PyTorch-parity NCHW


def _reference(x, weight, bias, stride, negative_slope=0.2):
    """Pure-JAX reference for ConvTranspose2d (padding=0) + LeakyReLU."""
    N, C_in, H, W = x.shape
    _, C_out, K, _ = weight.shape
    s = stride
    H_out = (H - 1) * s + K
    W_out = (W - 1) * s + K
    out = jnp.zeros((N, C_out, H_out, W_out), jnp.float32)
    for kh in range(K):
        for kw in range(K):
            contrib = jnp.einsum("nihw,io->nohw", x, weight[:, :, kh, kw])
            out = out.at[
                :, :, kh:kh + s * (H - 1) + 1:s, kw:kw + s * (W - 1) + 1:s
            ].add(contrib)
    out = out + bias[None, :, None, None]
    return jnp.where(out >= 0, out, negative_slope * out)


if __name__ == "__main__":
    # DeepCMorph's smallest decoder stage: UpsampleConvLayer(128, 64, 2) -> K=2, stride=2.
    N, C_in, C_out, H, W, K, stride = 2, 128, 64, 16, 16, 2, 2

    key = jax.random.PRNGKey(0)
    kx, kw, kb = jax.random.split(key, 3)
    x = jax.random.normal(kx, (N, C_in, H, W), dtype=jnp.float32)
    weight = 0.1 * jax.random.normal(kw, (C_in, C_out, K, K), dtype=jnp.float32)
    bias = 0.1 * jax.random.normal(kb, (C_out,), dtype=jnp.float32)

    ref = _reference(x, weight, bias, stride)
    out_shape = (N, C_out, (H - 1) * stride + K, (W - 1) * stride + K)

    # Perf-default path: bf16 operands + bf16 output (dominant HBM stream halved).
    out_bf16 = jax.block_until_ready(upsample_conv_layer(x, weight, bias, stride=stride))
    assert out_bf16.shape == ref.shape == out_shape
    assert jnp.allclose(out_bf16.astype(jnp.float32), ref, atol=1e-1, rtol=1e-1)

    # Full-precision path (matches the PyTorch module's f32 semantics).
    out_f32 = jax.block_until_ready(
        upsample_conv_layer(x, weight, bias, stride=stride,
                            compute_dtype=jnp.float32, out_dtype=jnp.float32))
    assert out_f32.shape == out_shape
    assert jnp.allclose(out_f32, ref, atol=5e-2, rtol=5e-2)

    # NHWC fast path (no post-kernel transpose) must agree with the NCHW result.
    out_nhwc = jax.block_until_ready(
        upsample_conv_layer(x, weight, bias, stride=stride, output_layout="NHWC"))
    assert jnp.array_equal(jnp.transpose(out_nhwc, (0, 3, 1, 2)), out_bf16)

    print("KERNEL_OK")
</pallas_src>

<mosaic_0001>
module attributes {stable_mosaic.version = 11 : i64} {
  func.func @_upsample_conv_kernel(%arg0: i32, %arg1: i32, %arg2: memref<1x128x128xf32, #tpu.memory_space<vmem>>, %arg3: memref<128x256xbf16, #tpu.memory_space<vmem>>, %arg4: memref<1x256xf32, #tpu.memory_space<vmem>>, %arg5: memref<1x8x2x16x128xbf16, #tpu.memory_space<vmem>>) attributes {dimension_semantics = [#tpu.dimension_semantics<parallel>, #tpu.dimension_semantics<parallel>], iteration_bounds = array<i64: 2, 2>, scalar_prefetch = 0 : i64, scratch_operands = 0 : i64, tpu.core_type = #tpu.core_type<tc>, window_params = [{transform_indices = @transform_0, window_bounds = array<i64: 1, 128, 128>}, {pipeline_mode = #tpu.pipeline_mode<synchronous>, transform_indices = @transform_1, window_bounds = array<i64: 128, 256>}, {pipeline_mode = #tpu.pipeline_mode<synchronous>, transform_indices = @transform_2, window_bounds = array<i64: 1, 256>}, {transform_indices = @transform_3, window_bounds = array<i64: 1, 8, 2, 16, 128>}]} {
    %c0 = arith.constant 0 : index
    %c0_0 = arith.constant 0 : index
    %c0_1 = arith.constant 0 : index
    %0 = vector.load %arg2[%c0, %c0_0, %c0_1] : memref<1x128x128xf32, #tpu.memory_space<vmem>>, vector<1x128x128xf32>
    %1 = vector.shape_cast %0 : vector<1x128x128xf32> to vector<128x128xf32>
    %2 = arith.truncf %1 : vector<128x128xf32> to vector<128x128xbf16>
    %c0_2 = arith.constant 0 : index
    %c0_3 = arith.constant 0 : index
    %3 = vector.load %arg3[%c0_2, %c0_3] : memref<128x256xbf16, #tpu.memory_space<vmem>>, vector<128x256xbf16>
    %cst = arith.constant dense<0.000000e+00> : vector<128x256xf32>
    %4 = tpu.matmul %2, %3, %cst {dimension_numbers = #tpu.dot_dimension_numbers<[0], [0], [1], [1], [0, 1, 1, 1], [], []>} : vector<128x128xbf16>, vector<128x256xbf16>, vector<128x256xf32> -> vector<128x256xf32>
    %c0_4 = arith.constant 0 : index
    %c0_5 = arith.constant 0 : index
    %5 = vector.load %arg4[%c0_4, %c0_5] : memref<1x256xf32, #tpu.memory_space<vmem>>, vector<1x256xf32>
    %6 = vector.broadcast %5 : vector<1x256xf32> to vector<128x256xf32>
    %7 = arith.addf %4, %6 : vector<128x256xf32>
    %cst_6 = arith.constant 0.000000e+00 : f32
    %8 = vector.broadcast %cst_6 : f32 to vector<128x256xf32>
    %9 = arith.cmpf oge, %7, %8 : vector<128x256xf32>
    %cst_7 = arith.constant 2.000000e-01 : f32
    %10 = vector.broadcast %cst_7 : f32 to vector<128x256xf32>
    %11 = arith.mulf %10, %7 : vector<128x256xf32>
    %12 = arith.select %9, %7, %11 : vector<128x256xi1>, vector<128x256xf32>
    %13 = vector.extract_strided_slice %12 {offsets = [0, 0], sizes = [128, 128], strides = [1, 1]} : vector<128x256xf32> to vector<128x128xf32>
    %14 = vector.shape_cast %13 : vector<128x128xf32> to vector<8x16x128xf32>
    %15 = arith.truncf %14 : vector<8x16x128xf32> to vector<8x16x128xbf16>
    %c0_8 = arith.constant 0 : index
    %c0_9 = arith.constant 0 : index
    %c0_10 = arith.constant 0 : index
    %c0_11 = arith.constant 0 : index
    %c0_12 = arith.constant 0 : index
    %16 = vector.load %arg5[%c0_8, %c0_9, %c0_10, %c0_11, %c0_12] : memref<1x8x2x16x128xbf16, #tpu.memory_space<vmem>>, vector<1x8x1x16x128xbf16>
    %17 = vector.shape_cast %16 : vector<1x8x1x16x128xbf16> to vector<8x16x128xbf16>
    %18 = vector.shape_cast %15 : vector<8x16x128xbf16> to vector<1x8x1x16x128xbf16>
    tpu.vector_store %arg5[%c0_8, %c0_9, %c0_10, %c0_11, %c0_12], %18 {strides = array<i32>} : memref<1x8x2x16x128xbf16, #tpu.memory_space<vmem>>, vector<1x8x1x16x128xbf16>,
    %19 = vector.extract_strided_slice %12 {offsets = [0, 128], sizes = [128, 128], strides = [1, 1]} : vector<128x256xf32> to vector<128x128xf32>
    %20 = vector.shape_cast %19 : vector<128x128xf32> to vector<8x16x128xf32>
    %21 = arith.truncf %20 : vector<8x16x128xf32> to vector<8x16x128xbf16>
    %c0_13 = arith.constant 0 : index
    %c0_14 = arith.constant 0 : index
    %c1 = arith.constant 1 : index
    %c0_15 = arith.constant 0 : index
    %c0_16 = arith.constant 0 : index
    %22 = vector.load %arg5[%c0_13, %c0_14, %c1, %c0_15, %c0_16] : memref<1x8x2x16x128xbf16, #tpu.memory_space<vmem>>, vector<1x8x1x16x128xbf16>
    %23 = vector.shape_cast %22 : vector<1x8x1x16x128xbf16> to vector<8x16x128xbf16>
    %24 = vector.shape_cast %21 : vector<8x16x128xbf16> to vector<1x8x1x16x128xbf16>
    tpu.vector_store %arg5[%c0_13, %c0_14, %c1, %c0_15, %c0_16], %24 {strides = array<i32>} : memref<1x8x2x16x128xbf16, #tpu.memory_space<vmem>>, vector<1x8x1x16x128xbf16>,
    return
  }
  func.func @transform_0(%arg0: i32, %arg1: i32) -> (i32, i32, i32) {
    %c0_i32 = arith.constant 0 : i32
    %c0_i32_0 = arith.constant 0 : i32
    return %arg0, %c0_i32, %arg1 : i32, i32, i32
  }
  func.func @transform_1(%arg0: i32, %arg1: i32) -> (i32, i32) {
    %c0_i32 = arith.constant 0 : i32
    %c0_i32_0 = arith.constant 0 : i32
    %c0_i32_1 = arith.constant 0 : i32
    return %c0_i32, %c0_i32_0 : i32, i32
  }
  func.func @transform_2(%arg0: i32, %arg1: i32) -> (i32, i32) {
    %c0_i32 = arith.constant 0 : i32
    %c0_i32_0 = arith.constant 0 : i32
    %c0_i32_1 = arith.constant 0 : i32
    return %c0_i32, %c0_i32_0 : i32, i32
  }
  func.func @transform_3(%arg0: i32, %arg1: i32) -> (i32, i32, i32, i32, i32) {
    %c0_i32 = arith.constant 0 : i32
    %c0_i32_0 = arith.constant 0 : i32
    %c0_i32_1 = arith.constant 0 : i32
    %c0_i32_2 = arith.constant 0 : i32
    return %arg0, %arg1, %c0_i32, %c0_i32_0, %c0_i32_1 : i32, i32, i32, i32, i32
  }
}

</mosaic_0001>

<llo_original>
// kernel: tpu_custom_call.1
$region0: #{tpu_custom_call.1}
  #allocation0 [shape = 'u32[]', space=smem, size = 0x4, offset = 0x4, fixed_abs, tag = 'smem constant byte address 0x4 - core index']
  #allocation1 [shape = 'u32[144,128]{1,0:T(1,128)}', space=vmem, size = 0x12000, scoped, tag = 'internal scratch']
  %s0 = inlined_call_operand.hbm [shape: f32[2,128,256], index: 0, kind: input, shape index: {}]
  %s1 = inlined_call_operand.hbm [shape: bf16[128,256], index: 1, kind: input, shape index: {}]
  %s2 = inlined_call_operand.vmem [shape: f32[1,256], index: 2, kind: input, shape index: {}]
  %s3 = inlined_call_operand.hbm [shape: bf16[2,16,2,16,128], index: 3, kind: output, shape index: {}]
  %s4 = sld [smem:[#allocation0]]
  $region53: #{tpu_custom_call.1} parent=0
    _
  %s6 = ssub.s32 1, %s4
  %s7 = scalar_select 0, %s6, %s4
  $region1: #{tpu_custom_call.1} parent=0
    #allocation2 [shape = 'u8[131072]{0}', space=vmem, size = 0x20000, scoped, tag = 'input window, operand 0']
    #allocation3 [shape = 's32[2]{0}', space=sflag, size = 0x8, scoped, tag = 'scoped memory for tpu_custom_call.1']
    #allocation4 [shape = 's32[2]{0}', space=sflag, size = 0x8, scoped, tag = 'scoped memory for tpu_custom_call.1']
    #allocation5 [shape = 'u8[65536]{0}', space=vmem, size = 0x10000, scoped, tag = 'input window, operand 1, single buffered']
    #allocation6 [shape = 's32[1]{0}', space=sflag, size = 0x4, scoped, tag = 'scoped memory for tpu_custom_call.1']
    #allocation7 [shape = 'u8[131072]{0}', space=vmem, size = 0x20000, scoped, tag = 'output window, operand 0']
    %8 = vsyncpa [#allocation3], 0
    %s9 = scalar_lea.sflag [#allocation3], 1
    %10 = vsyncpa %s9, 0
    %11 = vsyncpa [#allocation6], 0
    %12 = vsyncpa [#allocation4], 0
    %s13 = scalar_lea.sflag [#allocation4], 1
    %14 = vsyncpa %s13, 0
    loop: start=0, step=1, limit=6
    $region2: #{tpu_custom_call.1} parent=1 // loop_pre_header
      _
    $region3: #{tpu_custom_call.1} parent=1 // loop_header
      %s16 = sphi 0, %s20
      %p17 = scmp.ge.s32.totalorder %s16, 6
      %s23 = sphi 0, %s35
      %s24 = sphi 0, %s31
      %s25 = sphi 0, %s23
      %s26 = sphi 0, %s24
      %s27 = sphi 0, %s25
      %s28 = sphi 0, %s26
      %s40 = sphi 0, %s42
      %s43 = sphi 0, %s40
      %s44 = sphi 0, %s43
      %s60 = sphi 0, %s44
      %s64 = sphi 0, %s64
      %s66 = sphi 0, %s64
      %s67 = sphi 0, %s66
      %s81 = sphi 0, %s67
      %s85 = sphi 0, %s85
      %s87 = sphi 0, %s85
      %s88 = sphi 0, %s87
      %s102 = sphi 0, %s88
      %s110 = sphi 0, %s112
      %s113 = sphi 0, %s110
      %s114 = sphi 0, %s113
      %s130 = sphi 0, %s114
    $region4: #{tpu_custom_call.1} parent=1 // loop_header_branch
      %19 = sbr.rel (%p17) target = $region8
    $region5: #{tpu_custom_call.1} parent=1 // loop_body
      %s21 = ssub.s32 %s16, 1
      %s22 = ssub.s32 %s16, 2
      %s29 = sadd.s32 1, %s24
      %p30 = scmp.ge.s32.totalorder %s29, 2
      %s31 = scalar_select %p30, 0, %s29
      %s32 = sadd.s32 1, %s23
      %s33 = scalar_select %p30, %s32, %s23
      %p34 = scmp.ge.s32.totalorder %s33, 2
      %s35 = scalar_select %p34, 0, %s33
      %s36 = ssub.s32 %s23, %s35
      %s37 = ssub.s32 %s24, %s31
      %s38 = sor.u32 %s36, %s37
      %p39 = scmp.eq.s32.totalorder %s38, 0
      %s41 = sadd.s32 %s40, 1
      %s42 = scalar_select %p39, %s40, %s41
      %p45 = pneg %p39
      %p46 = scmp.eq.s32.totalorder %s16, 3
      %p47 = por %p45, %p46
      %p48 = scmp.ne.s32.totalorder %s40, %s43
      %p49 = scmp.eq.s32.totalorder %s16, 0
      %p50 = por %p48, %p49
      %p51 = scmp.ne.s32.totalorder %s40, %s43
      %p52 = scmp.eq.s32.totalorder %s21, 3
      %p53 = por %p51, %p52
      %p54 = scmp.ne.s32.totalorder %s43, %s44
      %p55 = scmp.eq.s32.totalorder %s21, 0
      %p56 = por %p54, %p55
      %p57 = scmp.ne.s32.totalorder %s43, %s44
      %p58 = scmp.eq.s32.totalorder %s22, 3
      %p59 = por %p57, %p58
      %p61 = scmp.ne.s32.totalorder %s44, %s60
      %p62 = scmp.eq.s32.totalorder %s22, 0
      %p63 = por %p61, %p62
      %s65 = sadd.s32 %s64, 1
      %p68 = scmp.eq.s32.totalorder %s16, 3
      %p69 = scmp.ne.s32.totalorder %s64, %s66
      %p70 = scmp.eq.s32.totalorder %s16, 0
      %p71 = por %p69, %p70
      %p72 = scmp.ne.s32.totalorder %s64, %s66
      %p73 = scmp.eq.s32.totalorder %s21, 3
      %p74 = por %p72, %p73
      %p75 = scmp.ne.s32.totalorder %s66, %s67
      %p76 = scmp.eq.s32.totalorder %s21, 0
      %p77 = por %p75, %p76
      %p78 = scmp.ne.s32.totalorder %s66, %s67
      %p79 = scmp.eq.s32.totalorder %s22, 3
      %p80 = por %p78, %p79
      %p82 = scmp.ne.s32.totalorder %s67, %s81
      %p83 = scmp.eq.s32.totalorder %s22, 0
      %p84 = por %p82, %p83
      %s86 = sadd.s32 %s85, 1
      %p89 = scmp.eq.s32.totalorder %s16, 3
      %p90 = scmp.ne.s32.totalorder %s85, %s87
      %p91 = scmp.eq.s32.totalorder %s16, 0
      %p92 = por %p90, %p91
      %p93 = scmp.ne.s32.totalorder %s85, %s87
      %p94 = scmp.eq.s32.totalorder %s21, 3
      %p95 = por %p93, %p94
      %p96 = scmp.ne.s32.totalorder %s87, %s88
      %p97 = scmp.eq.s32.totalorder %s21, 0
      %p98 = por %p96, %p97
      %p99 = scmp.ne.s32.totalorder %s87, %s88
      %p100 = scmp.eq.s32.totalorder %s22, 3
      %p101 = por %p99, %p100
      %p103 = scmp.ne.s32.totalorder %s88, %s102
      %p104 = scmp.eq.s32.totalorder %s22, 0
      %p105 = por %p103, %p104
      %s106 = ssub.s32 %s23, %s35
      %s107 = ssub.s32 %s24, %s31
      %s108 = sor.u32 %s106, %s107
      %p109 = scmp.eq.s32.totalorder %s108, 0
      %s111 = sadd.s32 %s110, 1
      %s112 = scalar_select %p109, %s110, %s111
      %p115 = pneg %p109
      %p116 = scmp.eq.s32.totalorder %s16, 3
      %p117 = por %p115, %p116
      %p118 = scmp.ne.s32.totalorder %s110, %s113
      %p119 = scmp.eq.s32.totalorder %s16, 0
      %p120 = por %p118, %p119
      %p121 = scmp.ne.s32.totalorder %s110, %s113
      %p122 = scmp.eq.s32.totalorder %s21, 3
      %p123 = por %p121, %p122
      %p124 = scmp.ne.s32.totalorder %s113, %s114
      %p125 = scmp.eq.s32.totalorder %s21, 0
      %p126 = por %p124, %p125
      %p127 = scmp.ne.s32.totalorder %s113, %s114
      %p128 = scmp.eq.s32.totalorder %s22, 3
      %p129 = por %p127, %p128
      %p131 = scmp.ne.s32.totalorder %s114, %s130
      %p132 = scmp.eq.s32.totalorder %s22, 0
      %p133 = por %p131, %p132
      %p134 = scmp.le.s32.totalorder 1, %s16
      %p135 = scmp.lt.s32.totalorder %s16, 5
      %p136 = pnand %p134, %p135
      %p137 = pneg %p136
      // Predicated region
      $region9: #{tpu_custom_call.1} parent=5 // pred_check
        _
      $region10: #{tpu_custom_call.1} parent=5 // pred_check_branch
        %139 = sbr.rel (%p136) target = $region12
      $region11: #{tpu_custom_call.1} parent=5 // pred_region
        %s140 = ssub.s32 %s16, 1
        // Predicated region
        $region13: #{tpu_custom_call.1} parent=11 // pred_check
          %p141 = pneg %p77
        $region14: #{tpu_custom_call.1} parent=11 // pred_check_branch
          %143 = sbr.rel (%p141) target = $region16
        $region15: #{tpu_custom_call.1} parent=11 // pred_region
          %s145 = ssub.s32 2048, 2048
          %146 = vsyncadd [#allocation6], %s145
          %s147 = sshll.u32 [#allocation5], 4
          %s148 = int_to_ptr.vmem [resolvable:$true] %s147
          %153 = dma.hbm_to_vmem [thread:$0]  %s1, 2048, %s148, [#allocation6], 128, 128, 8
        $region16: #{tpu_custom_call.1} parent=11 // pred_fallthru
          _
        // Predicated region
        $region17: #{tpu_custom_call.1} parent=11 // pred_check
          %p154 = pneg %p98
        $region18: #{tpu_custom_call.1} parent=11 // pred_check_branch
          %156 = sbr.rel (%p154) target = $region20
        $region19: #{tpu_custom_call.1} parent=11 // pred_region
          _
        $region20: #{tpu_custom_call.1} parent=11 // pred_fallthru
          _
      $region12: #{tpu_custom_call.1} parent=5 // pred_fallthru
        _
      %p157 = scmp.lt.s32.totalorder %s16, 4
      // Predicated region
      $region21: #{tpu_custom_call.1} parent=5 // pred_check
        %p158 = pneg %p157
      $region22: #{tpu_custom_call.1} parent=5 // pred_check_branch
        %160 = sbr.rel (%p158) target = $region24
      $region23: #{tpu_custom_call.1} parent=5 // pred_region
        // Predicated region
        $region25: #{tpu_custom_call.1} parent=23 // pred_check
          %p161 = pneg %p50
        $region26: #{tpu_custom_call.1} parent=23 // pred_check_branch
          %163 = sbr.rel (%p161) target = $region28
        $region27: #{tpu_custom_call.1} parent=23 // pred_region
          %s164 = sand.u32 %s40, 1
          %s165 = scalar_lea.sflag [#allocation3], %s164
          %s166 = sand.u32 %s40, 1
          %s167 = smul.addr %s166, 128
          %s168 = scalar_lea.vmem [#allocation2], %s167
          %s170 = ssub.s32 2048, 2048
          %171 = vsyncadd %s165, %s170
          %s172 = smul.addr %s23, 32
          %s173 = sadd.s32 %s24, %s172
          %s174 = smul.addr %s173, 128
          %s175 = scalar_lea.hbm %s0, %s174
          %s176 = sshll.u32 %s168, 4
          %s177 = int_to_ptr.vmem [resolvable:$true] %s176
          %182 = dma.hbm_to_vmem [thread:$0]  %s175, 2048, %s177, %s165, 256, 128, 8
        $region28: #{tpu_custom_call.1} parent=23 // pred_fallthru
          _
      $region24: #{tpu_custom_call.1} parent=5 // pred_fallthru
        _
      %p183 = scmp.le.s32.totalorder 1, %s16
      %p184 = scmp.lt.s32.totalorder %s16, 5
      %p185 = pnand %p183, %p184
      %p186 = pneg %p185
      // Predicated region
      $region29: #{tpu_custom_call.1} parent=5 // pred_check
        _
      $region30: #{tpu_custom_call.1} parent=5 // pred_check_branch
        %188 = sbr.rel (%p185) target = $region32
      $region31: #{tpu_custom_call.1} parent=5 // pred_region
        %s189 = ssub.s32 %s16, 1
        %s190 = sand.u32 %s43, 1
        %s191 = scalar_lea.sflag [#allocation3], %s190
        %s192 = sand.u32 %s43, 1
        %s193 = smul.addr %s192, 128
        %s194 = scalar_lea.vmem [#allocation2], %s193
        // Predicated region
        $region33: #{tpu_custom_call.1} parent=31 // pred_check
          %p195 = pneg %p56
        $region34: #{tpu_custom_call.1} parent=31 // pred_check_branch
          %197 = sbr.rel (%p195) target = $region36
        $region35: #{tpu_custom_call.1} parent=31 // pred_region
          %198 = dma.done %s191, 2048
        $region36: #{tpu_custom_call.1} parent=31 // pred_fallthru
          _
        // Predicated region
        $region37: #{tpu_custom_call.1} parent=31 // pred_check
          %p199 = pneg %p77
        $region38: #{tpu_custom_call.1} parent=31 // pred_check_branch
          %201 = sbr.rel (%p199) target = $region40
        $region39: #{tpu_custom_call.1} parent=31 // pred_region
          %202 = dma.done [#allocation6], 2048
        $region40: #{tpu_custom_call.1} parent=31 // pred_fallthru
          _
        %s203 = sand.u32 %s43, 1
        %s204 = scalar_lea.sflag [#allocation3], %s203
        %s205 = sand.u32 %s43, 1
        %s206 = smul.addr %s205, 128
        %s207 = scalar_lea.vmem [#allocation2], %s206
        %p208 = pneg %p56
        %p209 = pneg %p53
        %p210 = pneg %p77
        %p211 = pneg %p74
        %p212 = pneg %p98
        %p213 = pneg %p95
        %p214 = pneg %p126
        %p215 = pneg %p123
        %s216 = sand.u32 %s113, 1
        %s217 = scalar_lea.sflag [#allocation4], %s216
        %s218 = sand.u32 %s113, 1
        %s219 = smul.addr %s218, 128
        %s220 = scalar_lea.vmem [#allocation7], %s219
        %s221 = smul.u32 8, %s26
        %v223 = vld [vmem:[%s194] sm:$0xff]
        %v224 = vld [vmem:[%s194 + $0x8] sm:$0xff]
        %v225 = vld [vmem:[%s194 + $0x10] sm:$0xff]
        %v226 = vld [vmem:[%s194 + $0x18] sm:$0xff]
        %v227 = vld [vmem:[%s194 + $0x20] sm:$0xff]
        %v228 = vld [vmem:[%s194 + $0x28] sm:$0xff]
        %v229 = vld [vmem:[%s194 + $0x30] sm:$0xff]
        %v230 = vld [vmem:[%s194 + $0x38] sm:$0xff]
        %v231 = vld [vmem:[%s194 + $0x40] sm:$0xff]
        %v232 = vld [vmem:[%s194 + $0x48] sm:$0xff]
        %v233 = vld [vmem:[%s194 + $0x50] sm:$0xff]
        %v234 = vld [vmem:[%s194 + $0x58] sm:$0xff]
        %v235 = vld [vmem:[%s194 + $0x60] sm:$0xff]
        %v236 = vld [vmem:[%s194 + $0x68] sm:$0xff]
        %v237 = vld [vmem:[%s194 + $0x70] sm:$0xff]
        %v238 = vld [vmem:[%s194 + $0x78] sm:$0xff]
        %v239 = vpack.c.bf16 %v224, %v223
        %v240 = vpack.c.bf16 %v226, %v225
        %v241 = vpack.c.bf16 %v228, %v227
        %v242 = vpack.c.bf16 %v230, %v229
        %v243 = vpack.c.bf16 %v232, %v231
        %v244 = vpack.c.bf16 %v234, %v233
        %v245 = vpack.c.bf16 %v236, %v235
        %v246 = vpack.c.bf16 %v238, %v237
        %v247 = vld [vmem:[#allocation5] sm:$0xff]
        %v248 = vld [vmem:[#allocation5 + $0x8] sm:$0xff]
        %v249 = vld [vmem:[#allocation5 + $0x10] sm:$0xff]
        %v250 = vld [vmem:[#allocation5 + $0x18] sm:$0xff]
        %v251 = vld [vmem:[#allocation5 + $0x20] sm:$0xff]
        %v252 = vld [vmem:[#allocation5 + $0x28] sm:$0xff]
        %v253 = vld [vmem:[#allocation5 + $0x30] sm:$0xff]
        %v254 = vld [vmem:[#allocation5 + $0x38] sm:$0xff]
        %v255 = vld [vmem:[#allocation5 + $0x40] sm:$0xff]
        %v256 = vld [vmem:[#allocation5 + $0x48] sm:$0xff]
        %v257 = vld [vmem:[#allocation5 + $0x50] sm:$0xff]
        %v258 = vld [vmem:[#allocation5 + $0x58] sm:$0xff]
        %v259 = vld [vmem:[#allocation5 + $0x60] sm:$0xff]
        %v260 = vld [vmem:[#allocation5 + $0x68] sm:$0xff]
        %v261 = vld [vmem:[#allocation5 + $0x70] sm:$0xff]
        %v262 = vld [vmem:[#allocation5 + $0x78] sm:$0xff]
        %v263 = vld [vmem:[%s2] sm:$0x3]
        %v265 = vlaneseq
        %v266 = vshrl.u32 %v265, 7
        %v267 = vsub.s32 0, %v266
        %v268 = vrot.slane %v263, %v267
        %v269 = vlaneseq
        %v270 = vshrl.u32 %v269, 7
        %v271 = vsub.s32 1, %v270
        %v272 = vrot.slane %v263, %v271
        %275 = vxpose.xlu0.c.b16.start [1/8] %v239, 128
        %276 = vxpose.xlu0.c.b16.cont [2/8] %v240, 128
        %277 = vxpose.xlu0.c.b16.cont [3/8] %v241, 128
        %278 = vxpose.xlu0.c.b16.cont [4/8] %v242, 128
        %279 = vxpose.xlu0.c.b16.cont [5/8] %v243, 128
        %280 = vxpose.xlu0.c.b16.cont [6/8] %v244, 128
        %281 = vxpose.xlu0.c.b16.cont [7/8] %v245, 128
        %282 = vxpose.xlu0.c.b16.end [8/8] %v246, 128
        %v283 = vpop.trf.xlu0
        %v284 = vpop.trf.xlu0
        %v285 = vpop.trf.xlu0
        %v286 = vpop.trf.xlu0
        %v287 = vpop.trf.xlu0
        %v288 = vpop.trf.xlu0
        %v289 = vpop.trf.xlu0
        %v290 = vpop.trf.xlu0
        %v307 = vunpack.c.l.b16 %v247
        %v308 = vunpack.c.h.b16 %v247
        %v309 = vunpack.c.l.b16 %v248
        %v310 = vunpack.c.h.b16 %v248
        %v311 = vunpack.c.l.b16 %v249
        %v312 = vunpack.c.h.b16 %v249
        %v313 = vunpack.c.l.b16 %v250
        %v314 = vunpack.c.h.b16 %v250
        %v315 = vunpack.c.l.b16 %v251
        %v316 = vunpack.c.h.b16 %v251
        %v317 = vunpack.c.l.b16 %v252
        %v318 = vunpack.c.h.b16 %v252
        %v319 = vunpack.c.l.b16 %v253
        %v320 = vunpack.c.h.b16 %v253
        %v321 = vunpack.c.l.b16 %v254
        %v322 = vunpack.c.h.b16 %v254
        %v323 = vunpack.c.l.b16 %v255
        %v324 = vunpack.c.h.b16 %v255
        %v325 = vunpack.c.l.b16 %v256
        %v326 = vunpack.c.h.b16 %v256
        %v327 = vunpack.c.l.b16 %v257
        %v328 = vunpack.c.h.b16 %v257
        %v329 = vunpack.c.l.b16 %v258
        %v330 = vunpack.c.h.b16 %v258
        %v331 = vunpack.c.l.b16 %v259
        %v332 = vunpack.c.h.b16 %v259
        %v333 = vunpack.c.l.b16 %v260
        %v334 = vunpack.c.h.b16 %v260
        %v335 = vunpack.c.l.b16 %v261
        %v336 = vunpack.c.h.b16 %v261
        %v337 = vunpack.c.l.b16 %v262
        %v338 = vunpack.c.h.b16 %v262
        %v339 = vpack.c.b16 %v309, %v307
        %v340 = vpack.c.b16 %v310, %v308
        %v341 = vpack.c.b16 %v313, %v311
        %v342 = vpack.c.b16 %v314, %v312
        %v343 = vpack.c.b16 %v317, %v315
        %v344 = vpack.c.b16 %v318, %v316
        %v345 = vpack.c.b16 %v321, %v319
        %v346 = vpack.c.b16 %v322, %v320
        %v347 = vpack.c.b16 %v325, %v323
        %v348 = vpack.c.b16 %v326, %v324
        %v349 = vpack.c.b16 %v329, %v327
        %v350 = vpack.c.b16 %v330, %v328
        %v351 = vpack.c.b16 %v333, %v331
        %v352 = vpack.c.b16 %v334, %v332
        %v353 = vpack.c.b16 %v337, %v335
        %v354 = vpack.c.b16 %v338, %v336
        %371 = vmatprep.subr.bf16.mxu0 %v354
        %372 = vmatpush1.bf16.msra.mxu0 %v353
        %373 = vmatprep.subr.bf16.mxu0 %v352
        %374 = vmatpush1.bf16.msra.mxu0 %v351
        %375 = vmatprep.subr.bf16.mxu0 %v350
        %376 = vmatpush1.bf16.msra.mxu0 %v349
        %377 = vmatprep.subr.bf16.mxu0 %v348
        %378 = vmatpush1.bf16.msra.mxu0 %v347
        %379 = vmatprep.subr.bf16.mxu0 %v346
        %380 = vmatpush1.bf16.msra.mxu0 %v345
        %381 = vmatprep.subr.bf16.mxu0 %v344
        %382 = vmatpush1.bf16.msra.mxu0 %v343
        %383 = vmatprep.subr.bf16.mxu0 %v342
        %384 = vmatpush1.bf16.msra.mxu0 %v341
        %385 = vmatprep.subr.bf16.mxu0 %v340
        %386 = vmatpush1.bf16.msra.mxu0 %v339
        %387 = vmatprep.subr.bf16.mxu0 0
        %388 = vmatpush2.bf16.msra.mxu0 0
        %389 = vmatprep.subr.bf16.mxu0 0
        %390 = vmatpush2.bf16.msra.mxu0 0
        %391 = vmatprep.subr.bf16.mxu0 0
        %392 = vmatpush2.bf16.msra.mxu0 0
        %393 = vmatprep.subr.bf16.mxu0 0
        %394 = vmatpush2.bf16.msra.mxu0 0
        %395 = vmatprep.subr.bf16.mxu0 0
        %396 = vmatpush2.bf16.msra.mxu0 0
        %397 = vmatprep.subr.bf16.mxu0 0
        %398 = vmatpush2.bf16.msra.mxu0 0
        %399 = vmatprep.subr.bf16.mxu0 0
        %400 = vmatpush2.bf16.msra.mxu0 0
        %401 = vmatprep.subr.bf16.mxu0 0
        %402 = vmatpush2.bf16.msra.mxu0 0
        %403 = vmatprep.mubr.bf16.mxu0 0
        %404 = vmatmul.mubr.bf16.gmra.mxu0 %v283
        %v405 = vpop.f32.mrf.mxu0
        %v406 = vadd.f32 %v268, %v405
        %v407 = vpop.f32.mrf.mxu0
        %v408 = vadd.f32 %v272, %v407
        %v409 = vpop.f32.mrf.mxu0
        %v410 = vadd.f32 %v268, %v409
        %v411 = vpop.f32.mrf.mxu0
        %v412 = vadd.f32 %v272, %v411
        %413 = vmatprep.mubr.bf16.mxu0 0
        %414 = vmatmul.mubr.bf16.gmra.mxu0 %v284
        %v415 = vpop.f32.mrf.mxu0
        %v416 = vadd.f32 %v268, %v415
        %v417 = vpop.f32.mrf.mxu0
        %v418 = vadd.f32 %v272, %v417
        %v419 = vpop.f32.mrf.mxu0
        %v420 = vadd.f32 %v268, %v419
        %v421 = vpop.f32.mrf.mxu0
        %v422 = vadd.f32 %v272, %v421
        %423 = vmatprep.mubr.bf16.mxu0 0
        %424 = vmatmul.mubr.bf16.gmra.mxu0 %v285
        %v425 = vpop.f32.mrf.mxu0
        %v426 = vadd.f32 %v268, %v425
        %v427 = vpop.f32.mrf.mxu0
        %v428 = vadd.f32 %v272, %v427
        %v429 = vpop.f32.mrf.mxu0
        %v430 = vadd.f32 %v268, %v429
        %v431 = vpop.f32.mrf.mxu0
        %v432 = vadd.f32 %v272, %v431
        %433 = vmatprep.mubr.bf16.mxu0 0
        %434 = vmatmul.mubr.bf16.gmra.mxu0 %v286
        %v435 = vpop.f32.mrf.mxu0
        %v436 = vadd.f32 %v268, %v435
        %v437 = vpop.f32.mrf.mxu0
        %v438 = vadd.f32 %v272, %v437
        %v439 = vpop.f32.mrf.mxu0
        %v440 = vadd.f32 %v268, %v439
        %v441 = vpop.f32.mrf.mxu0
        %v442 = vadd.f32 %v272, %v441
        %443 = vmatprep.mubr.bf16.mxu0 0
        %444 = vmatmul.mubr.bf16.gmra.mxu0 %v287
        %v445 = vpop.f32.mrf.mxu0
        %v446 = vadd.f32 %v268, %v445
        %v447 = vpop.f32.mrf.mxu0
        %v448 = vadd.f32 %v272, %v447
        %v449 = vpop.f32.mrf.mxu0
        %v450 = vadd.f32 %v268, %v449
        %v451 = vpop.f32.mrf.mxu0
        %v452 = vadd.f32 %v272, %v451
        %453 = vmatprep.mubr.bf16.mxu0 0
        %454 = vmatmul.mubr.bf16.gmra.mxu0 %v288
        %v455 = vpop.f32.mrf.mxu0
        %v456 = vadd.f32 %v268, %v455
        %v457 = vpop.f32.mrf.mxu0
        %v458 = vadd.f32 %v272, %v457
        %v459 = vpop.f32.mrf.mxu0
        %v460 = vadd.f32 %v268, %v459
        %v461 = vpop.f32.mrf.mxu0
        %v462 = vadd.f32 %v272, %v461
        %463 = vmatprep.mubr.bf16.mxu0 0
        %464 = vmatmul.mubr.bf16.gmra.mxu0 %v289
        %v465 = vpop.f32.mrf.mxu0
        %v466 = vadd.f32 %v268, %v465
        %v467 = vpop.f32.mrf.mxu0
        %v468 = vadd.f32 %v272, %v467
        %v469 = vpop.f32.mrf.mxu0
        %v470 = vadd.f32 %v268, %v469
        %v471 = vpop.f32.mrf.mxu0
        %v472 = vadd.f32 %v272, %v471
        %473 = vmatprep.mubr.bf16.mxu0 0
        %474 = vmatmul.mubr.bf16.gmra.mxu0 %v290
        %v475 = vpop.f32.mrf.mxu0
        %v476 = vadd.f32 %v268, %v475
        %v477 = vpop.f32.mrf.mxu0
        %v478 = vadd.f32 %v272, %v477
        %v479 = vpop.f32.mrf.mxu0
        %v480 = vadd.f32 %v268, %v479
        %v481 = vpop.f32.mrf.mxu0
        %v482 = vadd.f32 %v272, %v481
        %483 = vdwg.mxu0
        %vm484 = vcmp.ge.f32.partialorder %v406, 0.0
        %vm485 = vcmp.ge.f32.partialorder %v408, 0.0
        %vm486 = vcmp.ge.f32.partialorder %v410, 0.0
        %vm487 = vcmp.ge.f32.partialorder %v412, 0.0
        %vm488 = vcmp.ge.f32.partialorder %v416, 0.0
        %vm489 = vcmp.ge.f32.partialorder %v418, 0.0
        %vm490 = vcmp.ge.f32.partialorder %v420, 0.0
        %vm491 = vcmp.ge.f32.partialorder %v422, 0.0
        %vm492 = vcmp.ge.f32.partialorder %v426, 0.0
        %vm493 = vcmp.ge.f32.partialorder %v428, 0.0
        %vm494 = vcmp.ge.f32.partialorder %v430, 0.0
        %vm495 = vcmp.ge.f32.partialorder %v432, 0.0
        %vm496 = vcmp.ge.f32.partialorder %v436, 0.0
        %vm497 = vcmp.ge.f32.partialorder %v438, 0.0
        %vm498 = vcmp.ge.f32.partialorder %v440, 0.0
        %vm499 = vcmp.ge.f32.partialorder %v442, 0.0
        %vm500 = vcmp.ge.f32.partialorder %v446, 0.0
        %vm501 = vcmp.ge.f32.partialorder %v448, 0.0
        %vm502 = vcmp.ge.f32.partialorder %v450, 0.0
        %vm503 = vcmp.ge.f32.partialorder %v452, 0.0
        %vm504 = vcmp.ge.f32.partialorder %v456, 0.0
        %vm505 = vcmp.ge.f32.partialorder %v458, 0.0
        %vm506 = vcmp.ge.f32.partialorder %v460, 0.0
        %vm507 = vcmp.ge.f32.partialorder %v462, 0.0
        %vm508 = vcmp.ge.f32.partialorder %v466, 0.0
        %vm509 = vcmp.ge.f32.partialorder %v468, 0.0
        %vm510 = vcmp.ge.f32.partialorder %v470, 0.0
        %vm511 = vcmp.ge.f32.partialorder %v472, 0.0
        %vm512 = vcmp.ge.f32.partialorder %v476, 0.0
        %vm513 = vcmp.ge.f32.partialorder %v478, 0.0
        %vm514 = vcmp.ge.f32.partialorder %v480, 0.0
        %vm515 = vcmp.ge.f32.partialorder %v482, 0.0
        %v516 = vmul.f32 %v406, 0.2
        %v517 = vmul.f32 %v408, 0.2
        %v518 = vmul.f32 %v410, 0.2
        %v519 = vmul.f32 %v412, 0.2
        %v520 = vmul.f32 %v416, 0.2
        %v521 = vmul.f32 %v418, 0.2
        %v522 = vmul.f32 %v420, 0.2
        %v523 = vmul.f32 %v422, 0.2
        %v524 = vmul.f32 %v426, 0.2
        %v525 = vmul.f32 %v428, 0.2
        %v526 = vmul.f32 %v430, 0.2
        %v527 = vmul.f32 %v432, 0.2
        %v528 = vmul.f32 %v436, 0.2
        %v529 = vmul.f32 %v438, 0.2
        %v530 = vmul.f32 %v440, 0.2
        %v531 = vmul.f32 %v442, 0.2
        %v532 = vmul.f32 %v446, 0.2
        %v533 = vmul.f32 %v448, 0.2
        %v534 = vmul.f32 %v450, 0.2
        %v535 = vmul.f32 %v452, 0.2
        %v536 = vmul.f32 %v456, 0.2
        %v537 = vmul.f32 %v458, 0.2
        %v538 = vmul.f32 %v460, 0.2
        %v539 = vmul.f32 %v462, 0.2
        %v540 = vmul.f32 %v466, 0.2
        %v541 = vmul.f32 %v468, 0.2
        %v542 = vmul.f32 %v470, 0.2
        %v543 = vmul.f32 %v472, 0.2
        %v544 = vmul.f32 %v476, 0.2
        %v545 = vmul.f32 %v478, 0.2
        %v546 = vmul.f32 %v480, 0.2
        %v547 = vmul.f32 %v482, 0.2
        %v548 = vsel %vm484, %v406, %v516
        %v549 = vsel %vm485, %v408, %v517
        %v550 = vsel %vm486, %v410, %v518
        %v551 = vsel %vm487, %v412, %v519
        %v552 = vsel %vm488, %v416, %v520
        %v553 = vsel %vm489, %v418, %v521
        %v554 = vsel %vm490, %v420, %v522
        %v555 = vsel %vm491, %v422, %v523
        %v556 = vsel %vm492, %v426, %v524
        %v557 = vsel %vm493, %v428, %v525
        %v558 = vsel %vm494, %v430, %v526
        %v559 = vsel %vm495, %v432, %v527
        %v560 = vsel %vm496, %v436, %v528
        %v561 = vsel %vm497, %v438, %v529
        %v562 = vsel %vm498, %v440, %v530
        %v563 = vsel %vm499, %v442, %v531
        %v564 = vsel %vm500, %v446, %v532
        %v565 = vsel %vm501, %v448, %v533
        %v566 = vsel %vm502, %v450, %v534
        %v567 = vsel %vm503, %v452, %v535
        %v568 = vsel %vm504, %v456, %v536
        %v569 = vsel %vm505, %v458, %v537
        %v570 = vsel %vm506, %v460, %v538
        %v571 = vsel %vm507, %v462, %v539
        %v572 = vsel %vm508, %v466, %v540
        %v573 = vsel %vm509, %v468, %v541
        %v574 = vsel %vm510, %v470, %v542
        %v575 = vsel %vm511, %v472, %v543
        %v576 = vsel %vm512, %v476, %v544
        %v577 = vsel %vm513, %v478, %v545
        %v578 = vsel %vm514, %v480, %v546
        %v579 = vsel %vm515, %v482, %v547
        %v580 = vpack.c.bf16 %v550, %v548
        %v581 = vpack.c.bf16 %v554, %v552
        %v582 = vpack.c.bf16 %v558, %v556
        %v583 = vpack.c.bf16 %v562, %v560
        %v584 = vpack.c.bf16 %v566, %v564
        %v585 = vpack.c.bf16 %v570, %v568
        %v586 = vpack.c.bf16 %v574, %v572
        %v587 = vpack.c.bf16 %v578, %v576
        %v596 = vunpack.c.l.b16 %v580
        %v597 = vunpack.c.h.b16 %v580
        %v598 = vunpack.c.l.b16 %v581
        %v599 = vunpack.c.h.b16 %v581
        %v600 = vunpack.c.l.b16 %v582
        %v601 = vunpack.c.h.b16 %v582
        %v602 = vunpack.c.l.b16 %v583
        %v603 = vunpack.c.h.b16 %v583
        %v604 = vunpack.c.l.b16 %v584
        %v605 = vunpack.c.h.b16 %v584
        %v606 = vunpack.c.l.b16 %v585
        %v607 = vunpack.c.h.b16 %v585
        %v608 = vunpack.c.l.b16 %v586
        %v609 = vunpack.c.h.b16 %v586
        %v610 = vunpack.c.l.b16 %v587
        %v611 = vunpack.c.h.b16 %v587
        %v612 = vpack.c.b16 %v596, %v596
        %v613 = vpack.c.b16 %v597, %v597
        %v614 = vpack.c.b16 %v598, %v598
        %v615 = vpack.c.b16 %v599, %v599
        %v616 = vpack.c.b16 %v600, %v600
        %v617 = vpack.c.b16 %v601, %v601
        %v618 = vpack.c.b16 %v602, %v602
        %v619 = vpack.c.b16 %v603, %v603
        %v620 = vpack.c.b16 %v604, %v604
        %v621 = vpack.c.b16 %v605, %v605
        %v622 = vpack.c.b16 %v606, %v606
        %v623 = vpack.c.b16 %v607, %v607
        %v624 = vpack.c.b16 %v608, %v608
        %v625 = vpack.c.b16 %v609, %v609
        %v626 = vpack.c.b16 %v610, %v610
        %v627 = vpack.c.b16 %v611, %v611
        %644 = vst [vmem:[%s220] sm:$0xf] %v612
        %645 = vst [vmem:[%s220 + $0x4] sm:$0xf] %v613
        %646 = vst [vmem:[%s220 + $0x10] sm:$0xf] %v614
        %647 = vst [vmem:[%s220 + $0x14] sm:$0xf] %v615
        %648 = vst [vmem:[%s220 + $0x20] sm:$0xf] %v616
        %649 = vst [vmem:[%s220 + $0x24] sm:$0xf] %v617
        %650 = vst [vmem:[%s220 + $0x30] sm:$0xf] %v618
        %651 = vst [vmem:[%s220 + $0x34] sm:$0xf] %v619
        %652 = vst [vmem:[%s220 + $0x40] sm:$0xf] %v620
        %653 = vst [vmem:[%s220 + $0x44] sm:$0xf] %v621
        %654 = vst [vmem:[%s220 + $0x50] sm:$0xf] %v622
        %655 = vst [vmem:[%s220 + $0x54] sm:$0xf] %v623
        %656 = vst [vmem:[%s220 + $0x60] sm:$0xf] %v624
        %657 = vst [vmem:[%s220 + $0x64] sm:$0xf] %v625
        %658 = vst [vmem:[%s220 + $0x70] sm:$0xf] %v626
        %659 = vst [vmem:[%s220 + $0x74] sm:$0xf] %v627
        %v660 = vpack.c.bf16 %v551, %v549
        %v661 = vpack.c.bf16 %v555, %v553
        %v662 = vpack.c.bf16 %v559, %v557
        %v663 = vpack.c.bf16 %v563, %v561
        %v664 = vpack.c.bf16 %v567, %v565
        %v665 = vpack.c.bf16 %v571, %v569
        %v666 = vpack.c.bf16 %v575, %v573
        %v667 = vpack.c.bf16 %v579, %v577
        %v676 = vunpack.c.l.b16 %v660
        %v677 = vunpack.c.h.b16 %v660
        %v678 = vunpack.c.l.b16 %v661
        %v679 = vunpack.c.h.b16 %v661
        %v680 = vunpack.c.l.b16 %v662
        %v681 = vunpack.c.h.b16 %v662
        %v682 = vunpack.c.l.b16 %v663
        %v683 = vunpack.c.h.b16 %v663
        %v684 = vunpack.c.l.b16 %v664
        %v685 = vunpack.c.h.b16 %v664
        %v686 = vunpack.c.l.b16 %v665
        %v687 = vunpack.c.h.b16 %v665
        %v688 = vunpack.c.l.b16 %v666
        %v689 = vunpack.c.h.b16 %v666
        %v690 = vunpack.c.l.b16 %v667
        %v691 = vunpack.c.h.b16 %v667
        %v692 = vpack.c.b16 %v676, %v676
        %v693 = vpack.c.b16 %v677, %v677
        %v694 = vpack.c.b16 %v678, %v678
        %v695 = vpack.c.b16 %v679, %v679
        %v696 = vpack.c.b16 %v680, %v680
        %v697 = vpack.c.b16 %v681, %v681
        %v698 = vpack.c.b16 %v682, %v682
        %v699 = vpack.c.b16 %v683, %v683
        %v700 = vpack.c.b16 %v684, %v684
        %v701 = vpack.c.b16 %v685, %v685
        %v702 = vpack.c.b16 %v686, %v686
        %v703 = vpack.c.b16 %v687, %v687
        %v704 = vpack.c.b16 %v688, %v688
        %v705 = vpack.c.b16 %v689, %v689
        %v706 = vpack.c.b16 %v690, %v690
        %v707 = vpack.c.b16 %v691, %v691
        %s724 = scalar_lea.vmem %s220, 8 [#allocation7]
        %725 = vst [vmem:[%s724] sm:$0xf] %v692
        %726 = vst [vmem:[%s724 + $0x4] sm:$0xf] %v693
        %727 = vst [vmem:[%s724 + $0x10] sm:$0xf] %v694
        %728 = vst [vmem:[%s724 + $0x14] sm:$0xf] %v695
        %729 = vst [vmem:[%s724 + $0x20] sm:$0xf] %v696
        %730 = vst [vmem:[%s724 + $0x24] sm:$0xf] %v697
        %731 = vst [vmem:[%s724 + $0x30] sm:$0xf] %v698
        %732 = vst [vmem:[%s724 + $0x34] sm:$0xf] %v699
        %733 = vst [vmem:[%s724 + $0x40] sm:$0xf] %v700
        %734 = vst [vmem:[%s724 + $0x44] sm:$0xf] %v701
        %735 = vst [vmem:[%s724 + $0x50] sm:$0xf] %v702
        %736 = vst [vmem:[%s724 + $0x54] sm:$0xf] %v703
        %737 = vst [vmem:[%s724 + $0x60] sm:$0xf] %v704
        %738 = vst [vmem:[%s724 + $0x64] sm:$0xf] %v705
        %739 = vst [vmem:[%s724 + $0x70] sm:$0xf] %v706
        %740 = vst [vmem:[%s724 + $0x74] sm:$0xf] %v707
        %s741 = sand.u32 %s113, 1
        %s742 = scalar_lea.sflag [#allocation4], %s741
        %s743 = sand.u32 %s113, 1
        %s744 = smul.addr %s743, 128
        %s745 = scalar_lea.vmem [#allocation7], %s744
        // Predicated region
        $region41: #{tpu_custom_call.1} parent=31 // pred_check
          %p746 = pneg %p123
        $region42: #{tpu_custom_call.1} parent=31 // pred_check_branch
          %748 = sbr.rel (%p746) target = $region44
        $region43: #{tpu_custom_call.1} parent=31 // pred_region
          %s749 = smul.u32 8, %s26
          %s751 = ssub.s32 2048, 2048
          %752 = vsyncadd %s742, %s751
          %s753 = smul.addr %s749, 4
          %s754 = smul.addr %s25, 64
          %s755 = sadd.s32 %s753, %s754
          %s756 = smul.addr %s755, 64
          %s757 = scalar_lea.hbm %s3, %s756
          %s758 = sshll.u32 %s745, 4
          %s759 = int_to_ptr.vmem [resolvable:$true] %s758
          %764 = dma.vmem_to_hbm [thread:$0]  %s759, 2048, %s757, %s742, 64, 64, 4
        $region44: #{tpu_custom_call.1} parent=31 // pred_fallthru
          _
      $region32: #{tpu_custom_call.1} parent=5 // pred_fallthru
        _
      %p765 = scmp.le.s32.totalorder 2, %s16
      // Predicated region
      $region45: #{tpu_custom_call.1} parent=5 // pred_check
        %p766 = pneg %p765
      $region46: #{tpu_custom_call.1} parent=5 // pred_check_branch
        %768 = sbr.rel (%p766) target = $region48
      $region47: #{tpu_custom_call.1} parent=5 // pred_region
        %s769 = ssub.s32 %s16, 2
        // Predicated region
        $region49: #{tpu_custom_call.1} parent=47 // pred_check
          %p770 = pneg %p129
        $region50: #{tpu_custom_call.1} parent=47 // pred_check_branch
          %772 = sbr.rel (%p770) target = $region52
        $region51: #{tpu_custom_call.1} parent=47 // pred_region
          %s773 = sand.u32 %s114, 1
          %s774 = scalar_lea.sflag [#allocation4], %s773
          %s775 = sand.u32 %s114, 1
          %s776 = smul.addr %s775, 128
          %s777 = scalar_lea.vmem [#allocation7], %s776
          %778 = dma.done %s774, 2048
        $region52: #{tpu_custom_call.1} parent=47 // pred_fallthru
          _
      $region48: #{tpu_custom_call.1} parent=5 // pred_fallthru
        _
    $region6: #{tpu_custom_call.1} parent=1 // loop_footer
      %s20 = sadd.s32 1, %s16
    $region7: #{tpu_custom_call.1} parent=1 // loop_footer_branch
      %15 = sbr.rel target = $region3
    $region8: #{tpu_custom_call.1} parent=1 // loop_exit
      _
    %779 = vsyncpa [#allocation3], 1
    %s780 = scalar_lea.sflag [#allocation3], 1
    %781 = vsyncpa %s780, 1
    %782 = vsyncpa [#allocation6], 1
    %783 = vsyncpa [#allocation4], 1
    %s784 = scalar_lea.sflag [#allocation4], 1
    %785 = vsyncpa %s784, 1

</llo_original>
